<compile_context>
chip_gen: v7x
topology: tpu7x:2x2x1
jax: 0.10.0
libtpu: 0.0.40
codegen_flags: <defaults>
</compile_context>

<pallas_src>
import functools

import jax
import jax.numpy as jnp
from jax.experimental import pallas as pl
from jax.experimental.pallas import tpu as pltpu


D_IN = 57                       # real input feature count (no host padding)
H1, H2, OUT = 30, 10, 2         # real layer widths
H1_P = 32                       # 30 -> 32
H2_P = 16                       # 10 -> 16
OUT_P = 80                      # 2  -> 80  (32 + 16 + 80 == 128: one lane-dense slab)
SLAB_W = H1_P + H2_P + OUT_P    # 128


def mlp_kernel(x_ref, w1_ref, b1_ref, w2_ref, b2_ref, w3_ref, b3_ref, out_ref):
    x = x_ref[...]                                            # (TB, 57) bf16

    # hidden1: Linear(57 -> 30) + ReLU   (output dim padded to 32)
    h1 = jnp.dot(x, w1_ref[...], preferred_element_type=jnp.float32) + b1_ref[...]
    h1 = jnp.maximum(h1, 0.0)                                 # (TB, 32) f32

    # hidden2: Linear(30 -> 10) + ReLU   (padded 32 -> 16)
    h2 = jnp.dot(h1.astype(jnp.bfloat16), w2_ref[...],
                 preferred_element_type=jnp.float32) + b2_ref[...]
    h2 = jnp.maximum(h2, 0.0)                                 # (TB, 16) f32

    # classifica: Linear(10 -> 2) + Sigmoid   (padded 16 -> 80)
    logits = jnp.dot(h2.astype(jnp.bfloat16), w3_ref[...],
                     preferred_element_type=jnp.float32) + b3_ref[...]
    o = jax.nn.sigmoid(logits)                                # (TB, 80) f32

    # One lane-dense 128-wide unmasked store; bf16 halves output HBM bytes.
    out_ref[...] = jnp.concatenate([h1, h2, o], axis=-1).astype(jnp.bfloat16)


def _round_up(v, m):
    return (v + m - 1) // m * m


def _choose_tiling(batch, tb):
    """Pick (padded batch, tile) — tile multiple of 8, waste < 8 * n_steps rows."""
    bp = _round_up(max(batch, 8), 8)
    n_steps = pl.cdiv(bp, tb)
    # Once there's enough work, force >= 2 steps so both v7x TensorCores pull
    # DMA concurrently (harmless single-TC no-op on v5e/v6e).
    if bp >= 2048:
        n_steps = max(n_steps, 2)
    tile = _round_up(pl.cdiv(bp, n_steps), 8)
    bp = _round_up(bp, tile)
    return bp, tile


def pack_params(params):
    """One-time padding/casting of weights (exact: padded rows/cols are zero)."""
    w1, b1, w2, b2, w3, b3 = params
    bf = jnp.bfloat16
    w1p = jnp.zeros((D_IN, H1_P), bf).at[:, :H1].set(w1.astype(bf))
    b1p = jnp.zeros((1, H1_P), jnp.float32).at[:, :H1].set(b1.reshape(1, -1))
    w2p = jnp.zeros((H1_P, H2_P), bf).at[:H1, :H2].set(w2.astype(bf))
    b2p = jnp.zeros((1, H2_P), jnp.float32).at[:, :H2].set(b2.reshape(1, -1))
    w3p = jnp.zeros((H2_P, OUT_P), bf).at[:H2, :OUT].set(w3.astype(bf))
    b3p = jnp.zeros((1, OUT_P), jnp.float32).at[:, :OUT].set(b3.reshape(1, -1))
    return w1p, b1p, w2p, b2p, w3p, b3p


def mlp_classifica_packed(x, params, tb=4096):
    """Performance path: returns the packed (Bp, 128) bf16 slab.

    Columns: [0:30]   = fc1 (ReLU of hidden1)
             [32:42]  = fc2 (ReLU of hidden2)
             [48:50]  = sigmoid output
    (remaining columns are padding; the sigmoid block's pad holds 0.5).
    """
    B = x.shape[0]
    Bp, TB = _choose_tiling(B, tb)

    # Only cast (and batch-pad if needed) x — no feature-dim padding pass.
    xb = x.astype(jnp.bfloat16)
    if Bp != B:
        xb = jnp.zeros((Bp, D_IN), jnp.bfloat16).at[:B].set(xb)

    w1p, b1p, w2p, b2p, w3p, b3p = pack_params(params)

    slab = pl.pallas_call(
        mlp_kernel,
        out_shape=jax.ShapeDtypeStruct((Bp, SLAB_W), jnp.bfloat16),
        grid=(Bp // TB,),
        in_specs=[
            # activations: tiled over batch (last dim 57 == full array dim)
            pl.BlockSpec((TB, D_IN), lambda i: (i, 0)),
            # weights / biases: constant index_map -> VMEM-resident across steps
            pl.BlockSpec((D_IN, H1_P), lambda i: (0, 0)),
            pl.BlockSpec((1, H1_P), lambda i: (0, 0)),
            pl.BlockSpec((H1_P, H2_P), lambda i: (0, 0)),
            pl.BlockSpec((1, H2_P), lambda i: (0, 0)),
            pl.BlockSpec((H2_P, OUT_P), lambda i: (0, 0)),
            pl.BlockSpec((1, OUT_P), lambda i: (0, 0)),
        ],
        out_specs=pl.BlockSpec((TB, SLAB_W), lambda i: (i, 0)),
        compiler_params=pltpu.CompilerParams(
            dimension_semantics=("parallel",),
        ),
    )(xb, w1p, b1p, w2p, b2p, w3p, b3p)
    return slab


def mlp_classifica(x, params, tb=4096):
    """Module-compatible path: returns (fc1, fc2, output) like the PyTorch module.

    Note: slicing the slab costs an extra (now bf16, i.e. half-size) pass over
    it; consumers that only need the packed result should call
    `mlp_classifica_packed` directly.
    """
    B = x.shape[0]
    slab = mlp_classifica_packed(x, params, tb=tb)
    fc1 = slab[:B, 0:H1].astype(jnp.float32)
    fc2 = slab[:B, H1_P:H1_P + H2].astype(jnp.float32)
    out = slab[:B, H1_P + H2_P:H1_P + H2_P + OUT].astype(jnp.float32)
    return fc1, fc2, out


def init_params(key):
    # Deterministic synthetic parameters matching nn.Linear shapes,
    # stored transposed: (in_features, out_features). Biases kept 2-D (1, out).
    k1, k2, k3, k4, k5, k6 = jax.random.split(key, 6)
    w1 = jax.random.normal(k1, (57, 30), jnp.float32) * 0.1
    b1 = jax.random.normal(k2, (1, 30), jnp.float32) * 0.1
    w2 = jax.random.normal(k3, (30, 10), jnp.float32) * 0.1
    b2 = jax.random.normal(k4, (1, 10), jnp.float32) * 0.1
    w3 = jax.random.normal(k5, (10, 2), jnp.float32) * 0.1
    b3 = jax.random.normal(k6, (1, 2), jnp.float32) * 0.1
    return (w1, b1, w2, b2, w3, b3)


if __name__ == "__main__":
    key = jax.random.PRNGKey(0)
    k_x, k_p = jax.random.split(key)

    B = 10  # small batch, deliberately NOT a multiple of 8 to exercise padding
    x = jax.random.normal(k_x, (B, 57), jnp.float32)
    params = init_params(k_p)

    fc1, fc2, out = jax.jit(mlp_classifica)(x, params)
    jax.block_until_ready((fc1, fc2, out))

    # Also exercise a multi-step grid (TB=8 -> 2 grid steps) and check it agrees.
    fc1b, fc2b, outb = jax.jit(functools.partial(mlp_classifica, tb=8))(x, params)
    jax.block_until_ready((fc1b, fc2b, outb))

    # Reference: same forward pass with bf16 matmul operands + f32 accumulation
    # and f32 elementwise (tolerance covers the bf16 rounding of the stored slab).
    w1, b1, w2, b2, w3, b3 = params
    bf = jnp.bfloat16
    r1 = jnp.maximum(
        jnp.dot(x.astype(bf), w1.astype(bf),
                preferred_element_type=jnp.float32) + b1, 0.0)
    r2 = jnp.maximum(
        jnp.dot(r1.astype(bf), w2.astype(bf),
                preferred_element_type=jnp.float32) + b2, 0.0)
    r3 = jax.nn.sigmoid(
        jnp.dot(r2.astype(bf), w3.astype(bf),
                preferred_element_type=jnp.float32) + b3)

    assert fc1.shape == (B, 30) and fc2.shape == (B, 10) and out.shape == (B, 2)
    assert jnp.allclose(fc1, r1, atol=1e-2, rtol=1e-2)
    assert jnp.allclose(fc2, r2, atol=1e-2, rtol=1e-2)
    assert jnp.allclose(out, r3, atol=1e-2, rtol=1e-2)
    assert jnp.allclose(fc1, fc1b, atol=1e-6)
    assert jnp.allclose(fc2, fc2b, atol=1e-6)
    assert jnp.allclose(out, outb, atol=1e-6)

    print("KERNEL_OK")
</pallas_src>

<mosaic_0001>
module attributes {stable_mosaic.version = 11 : i64} {
  func.func @mlp_kernel(%arg0: i32, %arg1: memref<16x57xbf16, #tpu.memory_space<vmem>>, %arg2: memref<57x32xbf16, #tpu.memory_space<vmem>>, %arg3: memref<1x32xf32, #tpu.memory_space<vmem>>, %arg4: memref<32x16xbf16, #tpu.memory_space<vmem>>, %arg5: memref<1x16xf32, #tpu.memory_space<vmem>>, %arg6: memref<16x80xbf16, #tpu.memory_space<vmem>>, %arg7: memref<1x80xf32, #tpu.memory_space<vmem>>, %arg8: memref<16x128xbf16, #tpu.memory_space<vmem>>) attributes {dimension_semantics = [#tpu.dimension_semantics<parallel>], iteration_bounds = array<i64: 1>, scalar_prefetch = 0 : i64, scratch_operands = 0 : i64, tpu.core_type = #tpu.core_type<tc>, window_params = [{transform_indices = @transform_0, window_bounds = array<i64: 16, 57>}, {pipeline_mode = #tpu.pipeline_mode<synchronous>, transform_indices = @transform_1, window_bounds = array<i64: 57, 32>}, {pipeline_mode = #tpu.pipeline_mode<synchronous>, transform_indices = @transform_2, window_bounds = array<i64: 1, 32>}, {pipeline_mode = #tpu.pipeline_mode<synchronous>, transform_indices = @transform_3, window_bounds = array<i64: 32, 16>}, {pipeline_mode = #tpu.pipeline_mode<synchronous>, transform_indices = @transform_4, window_bounds = array<i64: 1, 16>}, {pipeline_mode = #tpu.pipeline_mode<synchronous>, transform_indices = @transform_5, window_bounds = array<i64: 16, 80>}, {pipeline_mode = #tpu.pipeline_mode<synchronous>, transform_indices = @transform_6, window_bounds = array<i64: 1, 80>}, {transform_indices = @transform_7, window_bounds = array<i64: 16, 128>}]} {
    %c0 = arith.constant 0 : index
    %c0_0 = arith.constant 0 : index
    %0 = vector.load %arg1[%c0, %c0_0] : memref<16x57xbf16, #tpu.memory_space<vmem>>, vector<16x57xbf16>
    %c0_1 = arith.constant 0 : index
    %c0_2 = arith.constant 0 : index
    %1 = vector.load %arg2[%c0_1, %c0_2] : memref<57x32xbf16, #tpu.memory_space<vmem>>, vector<57x32xbf16>
    %cst = arith.constant dense<0.000000e+00> : vector<16x32xf32>
    %2 = tpu.matmul %0, %1, %cst {dimension_numbers = #tpu.dot_dimension_numbers<[1], [0], [0], [1], [0, 0, 1, 1], [], []>} : vector<16x57xbf16>, vector<57x32xbf16>, vector<16x32xf32> -> vector<16x32xf32>
    %c0_3 = arith.constant 0 : index
    %c0_4 = arith.constant 0 : index
    %3 = vector.load %arg3[%c0_3, %c0_4] : memref<1x32xf32, #tpu.memory_space<vmem>>, vector<1x32xf32>
    %4 = vector.broadcast %3 : vector<1x32xf32> to vector<16x32xf32>
    %5 = arith.addf %2, %4 : vector<16x32xf32>
    %cst_5 = arith.constant 0.000000e+00 : f32
    %6 = vector.broadcast %cst_5 : f32 to vector<16x32xf32>
    %7 = arith.maximumf %5, %6 : vector<16x32xf32>
    %8 = arith.truncf %7 : vector<16x32xf32> to vector<16x32xbf16>
    %c0_6 = arith.constant 0 : index
    %c0_7 = arith.constant 0 : index
    %9 = vector.load %arg4[%c0_6, %c0_7] : memref<32x16xbf16, #tpu.memory_space<vmem>>, vector<32x16xbf16>
    %cst_8 = arith.constant dense<0.000000e+00> : vector<16x16xf32>
    %10 = tpu.matmul %8, %9, %cst_8 {dimension_numbers = #tpu.dot_dimension_numbers<[1], [0], [0], [1], [0, 0, 1, 1], [], []>} : vector<16x32xbf16>, vector<32x16xbf16>, vector<16x16xf32> -> vector<16x16xf32>
    %c0_9 = arith.constant 0 : index
    %c0_10 = arith.constant 0 : index
    %11 = vector.load %arg5[%c0_9, %c0_10] : memref<1x16xf32, #tpu.memory_space<vmem>>, vector<1x16xf32>
    %12 = vector.broadcast %11 : vector<1x16xf32> to vector<16x16xf32>
    %13 = arith.addf %10, %12 : vector<16x16xf32>
    %cst_11 = arith.constant 0.000000e+00 : f32
    %14 = vector.broadcast %cst_11 : f32 to vector<16x16xf32>
    %15 = arith.maximumf %13, %14 : vector<16x16xf32>
    %16 = arith.truncf %15 : vector<16x16xf32> to vector<16x16xbf16>
    %c0_12 = arith.constant 0 : index
    %c0_13 = arith.constant 0 : index
    %17 = vector.load %arg6[%c0_12, %c0_13] : memref<16x80xbf16, #tpu.memory_space<vmem>>, vector<16x80xbf16>
    %cst_14 = arith.constant dense<0.000000e+00> : vector<16x80xf32>
    %18 = tpu.matmul %16, %17, %cst_14 {dimension_numbers = #tpu.dot_dimension_numbers<[1], [0], [0], [1], [0, 0, 1, 1], [], []>} : vector<16x16xbf16>, vector<16x80xbf16>, vector<16x80xf32> -> vector<16x80xf32>
    %c0_15 = arith.constant 0 : index
    %c0_16 = arith.constant 0 : index
    %19 = vector.load %arg7[%c0_15, %c0_16] : memref<1x80xf32, #tpu.memory_space<vmem>>, vector<1x80xf32>
    %20 = vector.broadcast %19 : vector<1x80xf32> to vector<16x80xf32>
    %21 = arith.addf %18, %20 : vector<16x80xf32>
    %22 = arith.negf %21 : vector<16x80xf32>
    %23 = math.exp %22 : vector<16x80xf32>
    %cst_17 = arith.constant 1.000000e+00 : f32
    %24 = vector.broadcast %cst_17 : f32 to vector<16x80xf32>
    %25 = arith.addf %24, %23 : vector<16x80xf32>
    %26 = arith.divf %24, %25 : vector<16x80xf32>
    %27 = tpu.concatenate %7, %15, %26 in 1 : vector<16x32xf32>, vector<16x16xf32>, vector<16x80xf32> -> vector<16x128xf32>
    %28 = arith.truncf %27 : vector<16x128xf32> to vector<16x128xbf16>
    %c0_18 = arith.constant 0 : index
    %c0_19 = arith.constant 0 : index
    %29 = vector.load %arg8[%c0_18, %c0_19] : memref<16x128xbf16, #tpu.memory_space<vmem>>, vector<16x128xbf16>
    tpu.vector_store %arg8[%c0_18, %c0_19], %28 {strides = array<i32>} : memref<16x128xbf16, #tpu.memory_space<vmem>>, vector<16x128xbf16>,
    return
  }
  func.func @transform_0(%arg0: i32) -> (i32, i32) {
    %c0_i32 = arith.constant 0 : i32
    %c0_i32_0 = arith.constant 0 : i32
    return %arg0, %c0_i32 : i32, i32
  }
  func.func @transform_1(%arg0: i32) -> (i32, i32) {
    %c0_i32 = arith.constant 0 : i32
    %c0_i32_0 = arith.constant 0 : i32
    %c0_i32_1 = arith.constant 0 : i32
    return %c0_i32, %c0_i32_0 : i32, i32
  }
  func.func @transform_2(%arg0: i32) -> (i32, i32) {
    %c0_i32 = arith.constant 0 : i32
    %c0_i32_0 = arith.constant 0 : i32
    %c0_i32_1 = arith.constant 0 : i32
    return %c0_i32, %c0_i32_0 : i32, i32
  }
  func.func @transform_3(%arg0: i32) -> (i32, i32) {
    %c0_i32 = arith.constant 0 : i32
    %c0_i32_0 = arith.constant 0 : i32
    %c0_i32_1 = arith.constant 0 : i32
    return %c0_i32, %c0_i32_0 : i32, i32
  }
  func.func @transform_4(%arg0: i32) -> (i32, i32) {
    %c0_i32 = arith.constant 0 : i32
    %c0_i32_0 = arith.constant 0 : i32
    %c0_i32_1 = arith.constant 0 : i32
    return %c0_i32, %c0_i32_0 : i32, i32
  }
  func.func @transform_5(%arg0: i32) -> (i32, i32) {
    %c0_i32 = arith.constant 0 : i32
    %c0_i32_0 = arith.constant 0 : i32
    %c0_i32_1 = arith.constant 0 : i32
    return %c0_i32, %c0_i32_0 : i32, i32
  }
  func.func @transform_6(%arg0: i32) -> (i32, i32) {
    %c0_i32 = arith.constant 0 : i32
    %c0_i32_0 = arith.constant 0 : i32
    %c0_i32_1 = arith.constant 0 : i32
    return %c0_i32, %c0_i32_0 : i32, i32
  }
  func.func @transform_7(%arg0: i32) -> (i32, i32) {
    %c0_i32 = arith.constant 0 : i32
    %c0_i32_0 = arith.constant 0 : i32
    return %arg0, %c0_i32 : i32, i32
  }
}

</mosaic_0001>

<llo_original>
// kernel: mlp_classifica.1
$region0: #{mlp_classifica.1}
  #allocation0 [shape = 'u32[]', space=smem, size = 0x4, offset = 0x4, fixed_abs, tag = 'smem constant byte address 0x4 - core index']
  #allocation1 [shape = 'u32[144,128]{1,0:T(1,128)}', space=vmem, size = 0x12000, scoped, tag = 'internal scratch']
  %s0 = inlined_call_operand.vmem [shape: bf16[16,57], index: 0, kind: input, shape index: {}]
  %s1 = inlined_call_operand.vmem [shape: bf16[57,32], index: 1, kind: input, shape index: {}]
  %s2 = inlined_call_operand.vmem [shape: f32[1,32], index: 2, kind: input, shape index: {}]
  %s3 = inlined_call_operand.vmem [shape: bf16[32,16], index: 3, kind: input, shape index: {}]
  %s4 = inlined_call_operand.vmem [shape: f32[1,16], index: 4, kind: input, shape index: {}]
  %s5 = inlined_call_operand.vmem [shape: bf16[16,80], index: 5, kind: input, shape index: {}]
  %s6 = inlined_call_operand.vmem [shape: f32[1,80], index: 6, kind: input, shape index: {}]
  %s7 = inlined_call_operand.vmem [shape: bf16[16,128], index: 7, kind: output, shape index: {}]
  %s8 = sld [smem:[#allocation0]]
  $region38: #{mlp_classifica.1} parent=0
    _
  %s10 = ssub.s32 1, %s8
  %s11 = scalar_select 0, %s10, %s8
  // Predicated region
  $region2: #{mlp_classifica.1} parent=0 // pred_check
    _
  $region3: #{mlp_classifica.1} parent=0 // pred_check_branch
    %13 = sbr.rel (0) target = $region5
  $region4: #{mlp_classifica.1} parent=0 // pred_region
    _
  $region5: #{mlp_classifica.1} parent=0 // pred_fallthru
    _
  // Predicated region
  $region6: #{mlp_classifica.1} parent=0 // pred_check
    _
  $region7: #{mlp_classifica.1} parent=0 // pred_check_branch
    %15 = sbr.rel (0) target = $region9
  $region8: #{mlp_classifica.1} parent=0 // pred_region
    _
  $region9: #{mlp_classifica.1} parent=0 // pred_fallthru
    _
  // Predicated region
  $region10: #{mlp_classifica.1} parent=0 // pred_check
    _
  $region11: #{mlp_classifica.1} parent=0 // pred_check_branch
    %17 = sbr.rel (0) target = $region13
  $region12: #{mlp_classifica.1} parent=0 // pred_region
    _
  $region13: #{mlp_classifica.1} parent=0 // pred_fallthru
    _
  // Predicated region
  $region14: #{mlp_classifica.1} parent=0 // pred_check
    _
  $region15: #{mlp_classifica.1} parent=0 // pred_check_branch
    %19 = sbr.rel (0) target = $region17
  $region16: #{mlp_classifica.1} parent=0 // pred_region
    _
  $region17: #{mlp_classifica.1} parent=0 // pred_fallthru
    _
  // Predicated region
  $region18: #{mlp_classifica.1} parent=0 // pred_check
    _
  $region19: #{mlp_classifica.1} parent=0 // pred_check_branch
    %21 = sbr.rel (0) target = $region21
  $region20: #{mlp_classifica.1} parent=0 // pred_region
    _
  $region21: #{mlp_classifica.1} parent=0 // pred_fallthru
    _
  // Predicated region
  $region22: #{mlp_classifica.1} parent=0 // pred_check
    _
  $region23: #{mlp_classifica.1} parent=0 // pred_check_branch
    %23 = sbr.rel (0) target = $region25
  $region24: #{mlp_classifica.1} parent=0 // pred_region
    _
  $region25: #{mlp_classifica.1} parent=0 // pred_fallthru
    _
  // Predicated region
  $region26: #{mlp_classifica.1} parent=0 // pred_check
    _
  $region27: #{mlp_classifica.1} parent=0 // pred_check_branch
    %25 = sbr.rel (0) target = $region29
  $region28: #{mlp_classifica.1} parent=0 // pred_region
    _
  $region29: #{mlp_classifica.1} parent=0 // pred_fallthru
    _
  %v27 = vld [vmem:[%s0] sm:$0xf]
  %v28 = vld [vmem:[%s0 + $0x4] sm:$0xf]
  %v29 = vld [vmem:[%s1] sm:$0xf]
  %v30 = vld [vmem:[%s1 + $0x4] sm:$0xf]
  %v31 = vld [vmem:[%s1 + $0x8] sm:$0xf]
  %v32 = vld [vmem:[%s1 + $0xc] sm:$0xf]
  %v33 = vld [vmem:[%s1 + $0x10] sm:$0xf]
  %v34 = vld [vmem:[%s1 + $0x14] sm:$0xf]
  %v35 = vld [vmem:[%s1 + $0x18] sm:$0xf]
  %v36 = vld [vmem:[%s1 + $0x1c] sm:$0x1]
  %v37 = vld [vmem:[%s2] sm:$0x1]
  %v39 = vlaneseq
  %v40 = vshrl.u32 %v39, 7
  %v41 = vsub.s32 0, %v40
  %v42 = vrot.slane %v37, %v41
  %v46 = vunpack.c.l.b16 %v27
  %v47 = vunpack.c.l.b16 %v28
  %v48 = vpack.c.b16 %v47, %v46
  %v57 = vunpack.c.l.b16 %v29
  %v58 = vunpack.c.l.b16 %v30
  %v59 = vunpack.c.l.b16 %v31
  %v60 = vunpack.c.l.b16 %v32
  %v61 = vunpack.c.l.b16 %v33
  %v62 = vunpack.c.l.b16 %v34
  %v63 = vunpack.c.l.b16 %v35
  %v64 = vunpack.c.l.b16 %v36
  %v65 = vpack.c.b16 %v58, %v57
  %v66 = vpack.c.b16 %v60, %v59
  %v67 = vpack.c.b16 %v62, %v61
  %v68 = vpack.c.b16 %v64, %v63
  %vm72 = vcmask 465920
  %v74 = vsel %vm72, %v48, 0
  %vm76 = vcmask 1043456
  %vm77 = vcmask 1044480
  %v78 = vsel %vm76, 4294967295, 65535
  %v79 = vsel %vm77, %v78, 0
  %v81 = vand.u32 %v68, %v79
  %83 = vmatprep.subr.bf16.mxu0 0
  %84 = vmatpush1.bf16.msra.mxu0 %v65
  %85 = vmatprep.subr.bf16.mxu0 0
  %86 = vmatpush1.bf16.msra.mxu0 %v66
  %87 = vmatprep.subr.bf16.mxu0 0
  %88 = vmatpush1.bf16.msra.mxu0 %v67
  %89 = vmatprep.subr.bf16.mxu0 0
  %90 = vmatpush1.bf16.msra.mxu0 %v81
  %91 = vmatprep.subr.bf16.mxu0 0
  %92 = vmatpush1.bf16.msra.mxu0 0
  %93 = vmatprep.subr.bf16.mxu0 0
  %94 = vmatpush1.bf16.msra.mxu0 0
  %95 = vmatprep.subr.bf16.mxu0 0
  %96 = vmatpush1.bf16.msra.mxu0 0
  %97 = vmatprep.subr.bf16.mxu0 0
  %98 = vmatpush1.bf16.msra.mxu0 0
  %99 = vmatprep.subr.bf16.mxu0 0
  %100 = vmatpush1.bf16.msra.mxu0 0
  %101 = vmatprep.subr.bf16.mxu0 0
  %102 = vmatpush1.bf16.msra.mxu0 0
  %103 = vmatprep.subr.bf16.mxu0 0
  %104 = vmatpush1.bf16.msra.mxu0 0
  %105 = vmatprep.subr.bf16.mxu0 0
  %106 = vmatpush1.bf16.msra.mxu0 0
  %107 = vmatprep.subr.bf16.mxu0 0
  %108 = vmatpush1.bf16.msra.mxu0 0
  %109 = vmatprep.subr.bf16.mxu0 0
  %110 = vmatpush1.bf16.msra.mxu0 0
  %111 = vmatprep.subr.bf16.mxu0 0
  %112 = vmatpush1.bf16.msra.mxu0 0
  %113 = vmatprep.subr.bf16.mxu0 0
  %114 = vmatpush1.bf16.msra.mxu0 0
  %115 = vmatprep.mubr.bf16.mxu0 0
  %116 = vmatmul.mubr.bf16.gmra.mrb[0].mxu0 %v74
  %v117 = vpop.f32.mrb[0].mxu0
  %v118 = vadd.f32 %v42, %v117
  %v119 = vpop.f32.mrb[0].mxu0
  %v120 = vpop.f32.mrb[0].mxu0
  %v121 = vadd.f32 %v42, %v120
  %v122 = vpop.f32.mrb[0].mxu0
  %123 = vdwg.mxu0
  %v124 = vmax.f32 %v118, 0.0
  %v125 = vmax.f32 %v121, 0.0
  %v126 = vpack.c.bf16 %v125, %v124
  %v127 = vld [vmem:[%s3] sm:$0xf]
  %v128 = vld [vmem:[%s3 + $0x4] sm:$0xf]
  %v129 = vld [vmem:[%s3 + $0x8] sm:$0xf]
  %v130 = vld [vmem:[%s3 + $0xc] sm:$0xf]
  %v131 = vld [vmem:[%s4] sm:$0x1]
  %v133 = vlaneseq
  %v134 = vshrl.u32 %v133, 7
  %v135 = vsub.s32 0, %v134
  %v136 = vrot.slane %v131, %v135
  %v142 = vunpack.c.l.b16 %v127
  %v143 = vunpack.c.l.b16 %v128
  %v144 = vunpack.c.l.b16 %v129
  %v145 = vunpack.c.l.b16 %v130
  %v146 = vpack.c.b16 %v143, %v142
  %v147 = vpack.c.b16 %v145, %v144
  %vm150 = vcmask 261120
  %v152 = vsel %vm150, %v126, 0
  %154 = vmatprep.subr.bf16.mxu0 0
  %155 = vmatpush1.bf16.msra.mxu0 %v146
  %156 = vmatprep.subr.bf16.mxu0 0
  %157 = vmatpush1.bf16.msra.mxu0 %v147
  %158 = vmatprep.subr.bf16.mxu0 0
  %159 = vmatpush1.bf16.msra.mxu0 0
  %160 = vmatprep.subr.bf16.mxu0 0
  %161 = vmatpush1.bf16.msra.mxu0 0
  %162 = vmatprep.subr.bf16.mxu0 0
  %163 = vmatpush1.bf16.msra.mxu0 0
  %164 = vmatprep.subr.bf16.mxu0 0
  %165 = vmatpush1.bf16.msra.mxu0 0
  %166 = vmatprep.subr.bf16.mxu0 0
  %167 = vmatpush1.bf16.msra.mxu0 0
  %168 = vmatprep.subr.bf16.mxu0 0
  %169 = vmatpush1.bf16.msra.mxu0 0
  %170 = vmatprep.subr.bf16.mxu0 0
  %171 = vmatpush1.bf16.msra.mxu0 0
  %172 = vmatprep.subr.bf16.mxu0 0
  %173 = vmatpush1.bf16.msra.mxu0 0
  %174 = vmatprep.subr.bf16.mxu0 0
  %175 = vmatpush1.bf16.msra.mxu0 0
  %176 = vmatprep.subr.bf16.mxu0 0
  %177 = vmatpush1.bf16.msra.mxu0 0
  %178 = vmatprep.subr.bf16.mxu0 0
  %179 = vmatpush1.bf16.msra.mxu0 0
  %180 = vmatprep.subr.bf16.mxu0 0
  %181 = vmatpush1.bf16.msra.mxu0 0
  %182 = vmatprep.subr.bf16.mxu0 0
  %183 = vmatpush1.bf16.msra.mxu0 0
  %184 = vmatprep.subr.bf16.mxu0 0
  %185 = vmatpush1.bf16.msra.mxu0 0
  %186 = vmatprep.mubr.bf16.mxu0 0
  %187 = vmatmul.mubr.bf16.gmra.mrb[0].mxu0 %v152
  %v188 = vpop.f32.mrb[0].mxu0
  %v189 = vadd.f32 %v136, %v188
  %v190 = vpop.f32.mrb[0].mxu0
  %v191 = vpop.f32.mrb[0].mxu0
  %v192 = vadd.f32 %v136, %v191
  %v193 = vpop.f32.mrb[0].mxu0
  %194 = vdwg.mxu0
  %v195 = vmax.f32 %v189, 0.0
  %v196 = vmax.f32 %v192, 0.0
  %v197 = vpack.c.bf16 %v196, %v195
  %v198 = vld [vmem:[%s5] sm:$0xf]
  %v199 = vld [vmem:[%s5 + $0x4] sm:$0xf]
  %v200 = vld [vmem:[%s6] sm:$0x1]
  %v202 = vlaneseq
  %v203 = vshrl.u32 %v202, 7
  %v204 = vsub.s32 0, %v203
  %v205 = vrot.slane %v200, %v204
  %v209 = vunpack.c.l.b16 %v198
  %v210 = vunpack.c.l.b16 %v199
  %v211 = vpack.c.b16 %v210, %v209
  %vm213 = vcmask 130048
  %v215 = vsel %vm213, %v197, 0
  %217 = vmatprep.subr.bf16.mxu0 0
  %218 = vmatpush1.bf16.msra.mxu0 %v211
  %219 = vmatprep.subr.bf16.mxu0 0
  %220 = vmatpush1.bf16.msra.mxu0 0
  %221 = vmatprep.subr.bf16.mxu0 0
  %222 = vmatpush1.bf16.msra.mxu0 0
  %223 = vmatprep.subr.bf16.mxu0 0
  %224 = vmatpush1.bf16.msra.mxu0 0
  %225 = vmatprep.subr.bf16.mxu0 0
  %226 = vmatpush1.bf16.msra.mxu0 0
  %227 = vmatprep.subr.bf16.mxu0 0
  %228 = vmatpush1.bf16.msra.mxu0 0
  %229 = vmatprep.subr.bf16.mxu0 0
  %230 = vmatpush1.bf16.msra.mxu0 0
  %231 = vmatprep.subr.bf16.mxu0 0
  %232 = vmatpush1.bf16.msra.mxu0 0
  %233 = vmatprep.subr.bf16.mxu0 0
  %234 = vmatpush1.bf16.msra.mxu0 0
  %235 = vmatprep.subr.bf16.mxu0 0
  %236 = vmatpush1.bf16.msra.mxu0 0
  %237 = vmatprep.subr.bf16.mxu0 0
  %238 = vmatpush1.bf16.msra.mxu0 0
  %239 = vmatprep.subr.bf16.mxu0 0
  %240 = vmatpush1.bf16.msra.mxu0 0
  %241 = vmatprep.subr.bf16.mxu0 0
  %242 = vmatpush1.bf16.msra.mxu0 0
  %243 = vmatprep.subr.bf16.mxu0 0
  %244 = vmatpush1.bf16.msra.mxu0 0
  %245 = vmatprep.subr.bf16.mxu0 0
  %246 = vmatpush1.bf16.msra.mxu0 0
  %247 = vmatprep.subr.bf16.mxu0 0
  %248 = vmatpush1.bf16.msra.mxu0 0
  %249 = vmatprep.mubr.bf16.mxu0 0
  %250 = vmatmul.mubr.bf16.gmra.mrb[0].mxu0 %v215
  %v251 = vpop.f32.mrb[0].mxu0
  %v252 = vadd.f32 %v205, %v251
  %v253 = vpop.f32.mrb[0].mxu0
  %v254 = vpop.f32.mrb[0].mxu0
  %v255 = vadd.f32 %v205, %v254
  %v256 = vpop.f32.mrb[0].mxu0
  %257 = vdwg.mxu0
  %v258 = vxor.u32 %v252, 2147483648
  %v259 = vxor.u32 %v255, 2147483648
  %v260 = vmul.f32 %v258, 1.442695
  %v261 = vpow.pop %v260
  %v262 = vmul.f32 %v259, 1.442695
  %v263 = vpow.pop %v262
  %v264 = vadd.f32 %v261, 1.0
  %v265 = vadd.f32 %v263, 1.0
  %v266 = vrcp.pop %v264
  %v267 = vmul.f32 1.0, %v266
  %v268 = vrcp.pop %v265
  %v269 = vmul.f32 1.0, %v268
  %272 = vrot.lane.b32.xlu0 %v195, 32
  %v273 = vpop.permute.xlu0 %272
  %274 = vrot.lane.b32.xlu0 %v196, 32
  %v275 = vpop.permute.xlu0 %274
  %280 = vrot.lane.b32.xlu0 %v267, 48
  %v281 = vpop.permute.xlu0 %280
  %282 = vrot.lane.b32.xlu0 %v269, 48
  %v283 = vpop.permute.xlu0 %282
  %v286 = vsel %vm150, %v124, %v273
  %v287 = vsel %vm150, %v125, %v275
  %vm288 = vcmask 392192
  %v289 = vsel %vm288, %v286, %v281
  %v290 = vsel %vm288, %v287, %v283
  %v291 = vpack.c.bf16 %v290, %v289
  %v293 = vunpack.c.l.b16 %v291
  %v294 = vunpack.c.h.b16 %v291
  %v295 = vpack.c.b16 %v293, %v293
  %v296 = vpack.c.b16 %v294, %v294
  %299 = vst [vmem:[%s7] sm:$0xf] %v295
  %300 = vst [vmem:[%s7 + $0x4] sm:$0xf] %v296
  // Predicated region
  $region30: #{mlp_classifica.1} parent=0 // pred_check
    _
  $region31: #{mlp_classifica.1} parent=0 // pred_check_branch
    %302 = sbr.rel (0) target = $region33
  $region32: #{mlp_classifica.1} parent=0 // pred_region
    _
  $region33: #{mlp_classifica.1} parent=0 // pred_fallthru
    _
  // Predicated region
  $region34: #{mlp_classifica.1} parent=0 // pred_check
    _
  $region35: #{mlp_classifica.1} parent=0 // pred_check_branch
    %304 = sbr.rel (0) target = $region37
  $region36: #{mlp_classifica.1} parent=0 // pred_region
    _
  $region37: #{mlp_classifica.1} parent=0 // pred_fallthru
    _

</llo_original>
